<compile_context>
chip_gen: v6e
topology: v6e:2x2x1
jax: 0.10.0
libtpu: 0.0.40
codegen_flags: <defaults>
</compile_context>

<pallas_src>
import jax
import jax.numpy as jnp
from jax.experimental import pallas as pl
from jax.experimental.pallas import tpu as pltpu


# ----------------------------- Pallas kernel --------------------------------
def _controller_policy_kernel(
    # inputs
    obs_ref,                     # (TN, D)
    w1cat_ref,                   # fused layer-1 weight: (D, 2H) = [cw1 | aw1o]
    cb1_ref,                     # controller layer-1 bias : (1, H)
    cw2_ref, cb2_ref,            # controller layer 2      : (H, H), (1, H)
    cw3_ref, cb3_ref,            # controller head         : (H, K), (1, K)
    aw1s_ref, ab1_ref,           # sub-actor layer-1 skill weight/bias: (K, H), (1, H)
    aw2_ref, ab2_ref,            # sub-actor layer 2       : (H, H), (1, H)
    aw3_ref, ab3_ref,            # sub-actor head          : (H, A), (1, A)
    # output
    packed_ref,                  # (TN, P) lane-dense slab: [actions | mean | dist | 0pad]
):
    obs = obs_ref[...]                                               # (TN, D)
    tn = obs.shape[0]
    hdim = cb1_ref.shape[-1]
    k = cw3_ref.shape[-1]
    a = aw3_ref.shape[-1]
    p = packed_ref.shape[-1]

    # ---- fused first layer: one MXU pass feeds both sub-policies ----
    h1 = jnp.dot(obs, w1cat_ref[...], preferred_element_type=jnp.float32)  # (TN, 2H)

    # ---- controller policy: Gaussian MLP over skills (deterministic mean) ----
    hc = jnp.tanh(h1[:, :hdim] + cb1_ref[...])
    hc = jnp.tanh(jnp.dot(hc, cw2_ref[...],
                          preferred_element_type=jnp.float32) + cb2_ref[...])
    mean = jnp.dot(hc, cw3_ref[...],
                   preferred_element_type=jnp.float32) + cb3_ref[...]       # (TN, K)

    # categorical skill distribution (max-subtracted softmax, exact reciprocal).
    m_max = jnp.max(mean, axis=-1, keepdims=True)
    e = jnp.exp(mean - m_max)
    skill_dist = e * pl.reciprocal(jnp.sum(e, axis=-1, keepdims=True), approx=False)

    # skill_choices = argmax(mean); skill_z = eye(K)[skill_choices]
    # (first-argmax tie-break to match torch/jnp argmax semantics).
    lane = jax.lax.broadcasted_iota(jnp.int32, mean.shape, 1)
    idx = jnp.min(jnp.where(mean == m_max, lane, jnp.int32(k)),
                  axis=-1, keepdims=True)
    skill_z = (lane == idx).astype(jnp.float32)                             # (TN, K)

    # ---- sub-actor: tanh MLP on concat(obs, skill_z) (split-weight form) ----
    ha = jnp.tanh(h1[:, hdim:]
                  + jnp.dot(skill_z, aw1s_ref[...], preferred_element_type=jnp.float32)
                  + ab1_ref[...])
    ha = jnp.tanh(jnp.dot(ha, aw2_ref[...],
                          preferred_element_type=jnp.float32) + ab2_ref[...])
    actions = jnp.tanh(jnp.dot(ha, aw3_ref[...],
                               preferred_element_type=jnp.float32) + ab3_ref[...])  # (TN, A)

    # ---- single lane-dense store (one unmasked vst per 128-lane slab) ----
    pad = jnp.zeros((tn, p - (a + 2 * k)), jnp.float32)
    packed_ref[...] = jnp.concatenate([actions, mean, skill_dist, pad], axis=-1)


# ------------------------------- wrapper -------------------------------------
def _round_up(x, m):
    return ((x + m - 1) // m) * m


def controller_policy_forward(obs, params, tile_n=1024):
    """obs: (T, B, obs_dim) f32.  Returns ((actions, mean, log_std, log_pi), skill_dist)."""
    t, b, d = obs.shape
    n = t * b
    obs_flat = obs.reshape(n, d)                                    # glue: view(t*b, -1)

    h = params["cb1"].shape[1]
    k = params["cw3"].shape[1]
    a = params["aw3"].shape[1]

    # lane-dense packed output width (actions | mean | skill_dist | zero pad)
    p_out = 128
    assert a + 2 * k <= p_out

    # tile over the batch axis; pad N up to a multiple of the tile
    tn = min(tile_n, _round_up(n, 8))
    n_pad = _round_up(n, tn)
    if n_pad != n:
        obs_flat = jnp.pad(obs_flat, ((0, n_pad - n), (0, 0)))
    grid = (n_pad // tn,)

    # fuse the two obs-consuming first-layer weights (glue, plain JAX, done once)
    w1cat = jnp.concatenate([params["cw1"], params["aw1o"]], axis=1)   # (D, 2H)

    weights = (
        w1cat, params["cb1"],
        params["cw2"], params["cb2"],
        params["cw3"], params["cb3"],
        params["aw1s"], params["ab1"],
        params["aw2"], params["ab2"],
        params["aw3"], params["ab3"],
    )

    in_specs = [pl.BlockSpec((tn, d), lambda i: (i, 0))]               # obs: tiled over N
    in_specs += [pl.BlockSpec(w.shape, lambda i: (0, 0)) for w in weights]  # VMEM-resident

    out_spec = pl.BlockSpec((tn, p_out), lambda i: (i, 0))
    out_shape = jax.ShapeDtypeStruct((n_pad, p_out), jnp.float32)

    # advisory cost estimate for the XLA scheduler
    flops = 2 * n_pad * (d * 2 * h + h * h + h * k + k * h + h * h + h * a)
    transcendentals = n_pad * (4 * h + a + k)                          # tanh + exp
    weight_bytes = 4 * sum(int(w.size) for w in weights)
    bytes_accessed = 4 * (n_pad * d + n_pad * p_out) + weight_bytes
    cost = pl.CostEstimate(flops=flops, transcendentals=transcendentals,
                           bytes_accessed=bytes_accessed)

    packed = pl.pallas_call(
        _controller_policy_kernel,
        out_shape=out_shape,
        grid=grid,
        in_specs=in_specs,
        out_specs=out_spec,
        compiler_params=pltpu.CompilerParams(dimension_semantics=("parallel",)),
        cost_estimate=cost,
    )(obs_flat, *weights)

    packed = packed[:n]
    actions = packed[:, :a]
    mean = packed[:, a:a + k]
    skill_dist = packed[:, a + k:a + 2 * k]

    # batch-constant quantities -> computed in the wrapper (no per-row HBM stores)
    log_std = jnp.broadcast_to(params["clogstd"], (n, k))
    half_log_2pi = jnp.float32(0.5 * 1.8378770664093453)
    log_pi = jnp.broadcast_to(
        jnp.sum(-params["clogstd"] - half_log_2pi, axis=-1, keepdims=True), (n, 1))

    return (actions, mean, log_std, log_pi), skill_dist


# ------------------------- parameter construction ----------------------------
def make_params(key, obs_dim, hidden, num_skills, action_dim):
    ks = jax.random.split(key, 8)
    s = 0.2
    return {
        # controller policy MLP (obs -> hidden -> hidden -> num_skills)
        "cw1": s * jax.random.normal(ks[0], (obs_dim, hidden), jnp.float32),
        "cb1": jnp.zeros((1, hidden), jnp.float32),
        "cw2": s * jax.random.normal(ks[1], (hidden, hidden), jnp.float32),
        "cb2": jnp.zeros((1, hidden), jnp.float32),
        "cw3": s * jax.random.normal(ks[2], (hidden, num_skills), jnp.float32),
        "cb3": jnp.zeros((1, num_skills), jnp.float32),
        "clogstd": -0.5 * jnp.ones((1, num_skills), jnp.float32),
        # sub-actor MLP ([obs, skill_z] -> hidden -> hidden -> action_dim), tanh output
        "aw1o": s * jax.random.normal(ks[3], (obs_dim, hidden), jnp.float32),
        "aw1s": s * jax.random.normal(ks[4], (num_skills, hidden), jnp.float32),
        "ab1": jnp.zeros((1, hidden), jnp.float32),
        "aw2": s * jax.random.normal(ks[5], (hidden, hidden), jnp.float32),
        "ab2": jnp.zeros((1, hidden), jnp.float32),
        "aw3": s * jax.random.normal(ks[6], (hidden, action_dim), jnp.float32),
        "ab3": jnp.zeros((1, action_dim), jnp.float32),
    }


# ------------------------------ reference ------------------------------------
def reference_forward(obs, params, num_skills):
    t, b, d = obs.shape
    x = obs.reshape(t * b, d)
    h = jnp.tanh(x @ params["cw1"] + params["cb1"])
    h = jnp.tanh(h @ params["cw2"] + params["cb2"])
    mean = h @ params["cw3"] + params["cb3"]
    log_std = jnp.broadcast_to(params["clogstd"], mean.shape)
    log_pi = jnp.sum(-log_std - 0.5 * jnp.log(2 * jnp.pi), axis=-1, keepdims=True)
    skill_dist = jax.nn.softmax(mean, axis=-1)
    skill_z = jax.nn.one_hot(jnp.argmax(mean, axis=-1), num_skills, dtype=jnp.float32)
    ha = jnp.tanh(x @ params["aw1o"] + skill_z @ params["aw1s"] + params["ab1"])
    ha = jnp.tanh(ha @ params["aw2"] + params["ab2"])
    actions = jnp.tanh(ha @ params["aw3"] + params["ab3"])
    return (actions, mean, log_std, log_pi), skill_dist


# --------------------------------- main ---------------------------------------
if __name__ == "__main__":
    T, B, OBS_DIM = 2, 4, 16
    HIDDEN, NUM_SKILLS, ACTION_DIM = 32, 4, 6

    key = jax.random.PRNGKey(0)
    k_obs, k_par = jax.random.split(key)
    obs = jax.random.normal(k_obs, (T, B, OBS_DIM), jnp.float32)
    params = make_params(k_par, OBS_DIM, HIDDEN, NUM_SKILLS, ACTION_DIM)

    (actions, mean, log_std, log_pi), skill_dist = jax.block_until_ready(
        controller_policy_forward(obs, params)
    )

    (a_ref, m_ref, ls_ref, lp_ref), sd_ref = reference_forward(obs, params, NUM_SKILLS)
    # matmul-dependent quantities: tolerance covers MXU f32 precision-path differences
    assert jnp.allclose(actions, a_ref, atol=1e-4)
    assert jnp.allclose(mean, m_ref, atol=1e-4)
    assert jnp.allclose(skill_dist, sd_ref, atol=1e-4)
    # closed-form quantities: tight
    assert jnp.allclose(log_std, ls_ref, atol=1e-6)
    assert jnp.allclose(log_pi, lp_ref, atol=1e-5)

    print("KERNEL_OK")
</pallas_src>

<mosaic_0001>
module attributes {stable_mosaic.version = 11 : i64} {
  func.func @_controller_policy_kernel(%arg0: i32, %arg1: memref<8x16xf32, #tpu.memory_space<vmem>>, %arg2: memref<16x64xf32, #tpu.memory_space<vmem>>, %arg3: memref<1x32xf32, #tpu.memory_space<vmem>>, %arg4: memref<32x32xf32, #tpu.memory_space<vmem>>, %arg5: memref<1x32xf32, #tpu.memory_space<vmem>>, %arg6: memref<32x4xf32, #tpu.memory_space<vmem>>, %arg7: memref<1x4xf32, #tpu.memory_space<vmem>>, %arg8: memref<4x32xf32, #tpu.memory_space<vmem>>, %arg9: memref<1x32xf32, #tpu.memory_space<vmem>>, %arg10: memref<32x32xf32, #tpu.memory_space<vmem>>, %arg11: memref<1x32xf32, #tpu.memory_space<vmem>>, %arg12: memref<32x6xf32, #tpu.memory_space<vmem>>, %arg13: memref<1x6xf32, #tpu.memory_space<vmem>>, %arg14: memref<8x128xf32, #tpu.memory_space<vmem>>) attributes {dimension_semantics = [#tpu.dimension_semantics<parallel>], iteration_bounds = array<i64: 1>, scalar_prefetch = 0 : i64, scratch_operands = 0 : i64, tpu.core_type = #tpu.core_type<tc>, window_params = [{transform_indices = @transform_0, window_bounds = array<i64: 8, 16>}, {pipeline_mode = #tpu.pipeline_mode<synchronous>, transform_indices = @transform_1, window_bounds = array<i64: 16, 64>}, {pipeline_mode = #tpu.pipeline_mode<synchronous>, transform_indices = @transform_2, window_bounds = array<i64: 1, 32>}, {pipeline_mode = #tpu.pipeline_mode<synchronous>, transform_indices = @transform_3, window_bounds = array<i64: 32, 32>}, {pipeline_mode = #tpu.pipeline_mode<synchronous>, transform_indices = @transform_4, window_bounds = array<i64: 1, 32>}, {pipeline_mode = #tpu.pipeline_mode<synchronous>, transform_indices = @transform_5, window_bounds = array<i64: 32, 4>}, {pipeline_mode = #tpu.pipeline_mode<synchronous>, transform_indices = @transform_6, window_bounds = array<i64: 1, 4>}, {pipeline_mode = #tpu.pipeline_mode<synchronous>, transform_indices = @transform_7, window_bounds = array<i64: 4, 32>}, {pipeline_mode = #tpu.pipeline_mode<synchronous>, transform_indices = @transform_8, window_bounds = array<i64: 1, 32>}, {pipeline_mode = #tpu.pipeline_mode<synchronous>, transform_indices = @transform_9, window_bounds = array<i64: 32, 32>}, {pipeline_mode = #tpu.pipeline_mode<synchronous>, transform_indices = @transform_10, window_bounds = array<i64: 1, 32>}, {pipeline_mode = #tpu.pipeline_mode<synchronous>, transform_indices = @transform_11, window_bounds = array<i64: 32, 6>}, {pipeline_mode = #tpu.pipeline_mode<synchronous>, transform_indices = @transform_12, window_bounds = array<i64: 1, 6>}, {transform_indices = @transform_13, window_bounds = array<i64: 8, 128>}]} {
    %c0 = arith.constant 0 : index
    %c0_0 = arith.constant 0 : index
    %0 = vector.load %arg1[%c0, %c0_0] : memref<8x16xf32, #tpu.memory_space<vmem>>, vector<8x16xf32>
    %c0_1 = arith.constant 0 : index
    %c0_2 = arith.constant 0 : index
    %1 = vector.load %arg2[%c0_1, %c0_2] : memref<16x64xf32, #tpu.memory_space<vmem>>, vector<16x64xf32>
    %cst = arith.constant dense<0.000000e+00> : vector<8x64xf32>
    %2 = tpu.matmul %0, %1, %cst {dimension_numbers = #tpu.dot_dimension_numbers<[1], [0], [0], [1], [0, 0, 1, 1], [], []>} : vector<8x16xf32>, vector<16x64xf32>, vector<8x64xf32> -> vector<8x64xf32>
    %3 = vector.extract_strided_slice %2 {offsets = [0, 0], sizes = [8, 32], strides = [1, 1]} : vector<8x64xf32> to vector<8x32xf32>
    %c0_3 = arith.constant 0 : index
    %c0_4 = arith.constant 0 : index
    %4 = vector.load %arg3[%c0_3, %c0_4] : memref<1x32xf32, #tpu.memory_space<vmem>>, vector<1x32xf32>
    %5 = vector.broadcast %4 : vector<1x32xf32> to vector<8x32xf32>
    %6 = arith.addf %3, %5 : vector<8x32xf32>
    %7 = math.tanh %6 : vector<8x32xf32>
    %c0_5 = arith.constant 0 : index
    %c0_6 = arith.constant 0 : index
    %8 = vector.load %arg4[%c0_5, %c0_6] : memref<32x32xf32, #tpu.memory_space<vmem>>, vector<32x32xf32>
    %cst_7 = arith.constant dense<0.000000e+00> : vector<8x32xf32>
    %9 = tpu.matmul %7, %8, %cst_7 {dimension_numbers = #tpu.dot_dimension_numbers<[1], [0], [0], [1], [0, 0, 1, 1], [], []>} : vector<8x32xf32>, vector<32x32xf32>, vector<8x32xf32> -> vector<8x32xf32>
    %c0_8 = arith.constant 0 : index
    %c0_9 = arith.constant 0 : index
    %10 = vector.load %arg5[%c0_8, %c0_9] : memref<1x32xf32, #tpu.memory_space<vmem>>, vector<1x32xf32>
    %11 = vector.broadcast %10 : vector<1x32xf32> to vector<8x32xf32>
    %12 = arith.addf %9, %11 : vector<8x32xf32>
    %13 = math.tanh %12 : vector<8x32xf32>
    %c0_10 = arith.constant 0 : index
    %c0_11 = arith.constant 0 : index
    %14 = vector.load %arg6[%c0_10, %c0_11] : memref<32x4xf32, #tpu.memory_space<vmem>>, vector<32x4xf32>
    %cst_12 = arith.constant dense<0.000000e+00> : vector<8x4xf32>
    %15 = tpu.matmul %13, %14, %cst_12 {dimension_numbers = #tpu.dot_dimension_numbers<[1], [0], [0], [1], [0, 0, 1, 1], [], []>} : vector<8x32xf32>, vector<32x4xf32>, vector<8x4xf32> -> vector<8x4xf32>
    %c0_13 = arith.constant 0 : index
    %c0_14 = arith.constant 0 : index
    %16 = vector.load %arg7[%c0_13, %c0_14] : memref<1x4xf32, #tpu.memory_space<vmem>>, vector<1x4xf32>
    %17 = vector.broadcast %16 : vector<1x4xf32> to vector<8x4xf32>
    %18 = arith.addf %15, %17 : vector<8x4xf32>
    %cst_15 = arith.constant dense<0xFF800000> : vector<8xf32>
    %19 = vector.multi_reduction <maximumf>, %18, %cst_15 [1] : vector<8x4xf32> to vector<8xf32>
    %20 = vector.shape_cast %19 : vector<8xf32> to vector<8x1xf32>
    %21 = vector.broadcast %20 : vector<8x1xf32> to vector<8x4xf32>
    %22 = arith.subf %18, %21 : vector<8x4xf32>
    %23 = math.exp %22 : vector<8x4xf32>
    %cst_16 = arith.constant dense<0.000000e+00> : vector<8xf32>
    %24 = vector.multi_reduction <add>, %23, %cst_16 [1] : vector<8x4xf32> to vector<8xf32>
    %25 = vector.shape_cast %24 : vector<8xf32> to vector<8x1xf32>
    %26 = tpu.reciprocal %25 : vector<8x1xf32> -> vector<8x1xf32>
    %27 = vector.broadcast %26 : vector<8x1xf32> to vector<8x4xf32>
    %28 = arith.mulf %23, %27 : vector<8x4xf32>
    %29 = tpu.iota {dimensions = array<i32: 1>} : vector<8x4xi32>
    %30 = vector.broadcast %20 : vector<8x1xf32> to vector<8x4xf32>
    %31 = arith.cmpf oeq, %18, %30 : vector<8x4xf32>
    %c4_i32 = arith.constant 4 : i32
    %32 = vector.broadcast %c4_i32 : i32 to vector<8x4xi32>
    %33 = arith.select %31, %29, %32 : vector<8x4xi1>, vector<8x4xi32>
    %cst_17 = arith.constant dense<2147483647> : vector<8xi32>
    %34 = vector.multi_reduction <minsi>, %33, %cst_17 [1] : vector<8x4xi32> to vector<8xi32>
    %35 = vector.shape_cast %34 : vector<8xi32> to vector<8x1xi32>
    %36 = vector.broadcast %35 : vector<8x1xi32> to vector<8x4xi32>
    %37 = arith.cmpi eq, %29, %36 : vector<8x4xi32>
    %38 = arith.extui %37 : vector<8x4xi1> to vector<8x4xi32>
    %39 = arith.sitofp %38 : vector<8x4xi32> to vector<8x4xf32>
    %40 = vector.extract_strided_slice %2 {offsets = [0, 32], sizes = [8, 32], strides = [1, 1]} : vector<8x64xf32> to vector<8x32xf32>
    %c0_18 = arith.constant 0 : index
    %c0_19 = arith.constant 0 : index
    %41 = vector.load %arg8[%c0_18, %c0_19] : memref<4x32xf32, #tpu.memory_space<vmem>>, vector<4x32xf32>
    %cst_20 = arith.constant dense<0.000000e+00> : vector<8x32xf32>
    %42 = tpu.matmul %39, %41, %cst_20 {dimension_numbers = #tpu.dot_dimension_numbers<[1], [0], [0], [1], [0, 0, 1, 1], [], []>} : vector<8x4xf32>, vector<4x32xf32>, vector<8x32xf32> -> vector<8x32xf32>
    %43 = arith.addf %40, %42 : vector<8x32xf32>
    %c0_21 = arith.constant 0 : index
    %c0_22 = arith.constant 0 : index
    %44 = vector.load %arg9[%c0_21, %c0_22] : memref<1x32xf32, #tpu.memory_space<vmem>>, vector<1x32xf32>
    %45 = vector.broadcast %44 : vector<1x32xf32> to vector<8x32xf32>
    %46 = arith.addf %43, %45 : vector<8x32xf32>
    %47 = math.tanh %46 : vector<8x32xf32>
    %c0_23 = arith.constant 0 : index
    %c0_24 = arith.constant 0 : index
    %48 = vector.load %arg10[%c0_23, %c0_24] : memref<32x32xf32, #tpu.memory_space<vmem>>, vector<32x32xf32>
    %cst_25 = arith.constant dense<0.000000e+00> : vector<8x32xf32>
    %49 = tpu.matmul %47, %48, %cst_25 {dimension_numbers = #tpu.dot_dimension_numbers<[1], [0], [0], [1], [0, 0, 1, 1], [], []>} : vector<8x32xf32>, vector<32x32xf32>, vector<8x32xf32> -> vector<8x32xf32>
    %c0_26 = arith.constant 0 : index
    %c0_27 = arith.constant 0 : index
    %50 = vector.load %arg11[%c0_26, %c0_27] : memref<1x32xf32, #tpu.memory_space<vmem>>, vector<1x32xf32>
    %51 = vector.broadcast %50 : vector<1x32xf32> to vector<8x32xf32>
    %52 = arith.addf %49, %51 : vector<8x32xf32>
    %53 = math.tanh %52 : vector<8x32xf32>
    %c0_28 = arith.constant 0 : index
    %c0_29 = arith.constant 0 : index
    %54 = vector.load %arg12[%c0_28, %c0_29] : memref<32x6xf32, #tpu.memory_space<vmem>>, vector<32x6xf32>
    %cst_30 = arith.constant dense<0.000000e+00> : vector<8x6xf32>
    %55 = tpu.matmul %53, %54, %cst_30 {dimension_numbers = #tpu.dot_dimension_numbers<[1], [0], [0], [1], [0, 0, 1, 1], [], []>} : vector<8x32xf32>, vector<32x6xf32>, vector<8x6xf32> -> vector<8x6xf32>
    %c0_31 = arith.constant 0 : index
    %c0_32 = arith.constant 0 : index
    %56 = vector.load %arg13[%c0_31, %c0_32] : memref<1x6xf32, #tpu.memory_space<vmem>>, vector<1x6xf32>
    %57 = vector.broadcast %56 : vector<1x6xf32> to vector<8x6xf32>
    %58 = arith.addf %55, %57 : vector<8x6xf32>
    %59 = math.tanh %58 : vector<8x6xf32>
    %cst_33 = arith.constant 0.000000e+00 : f32
    %60 = vector.broadcast %cst_33 : f32 to vector<8x114xf32>
    %61 = tpu.concatenate %59, %18, %28, %60 in 1 : vector<8x6xf32>, vector<8x4xf32>, vector<8x4xf32>, vector<8x114xf32> -> vector<8x128xf32>
    %c0_34 = arith.constant 0 : index
    %c0_35 = arith.constant 0 : index
    %62 = vector.load %arg14[%c0_34, %c0_35] : memref<8x128xf32, #tpu.memory_space<vmem>>, vector<8x128xf32>
    tpu.vector_store %arg14[%c0_34, %c0_35], %61 {strides = array<i32>} : memref<8x128xf32, #tpu.memory_space<vmem>>, vector<8x128xf32>,
    return
  }
  func.func @transform_0(%arg0: i32) -> (i32, i32) {
    %c0_i32 = arith.constant 0 : i32
    %c0_i32_0 = arith.constant 0 : i32
    return %arg0, %c0_i32 : i32, i32
  }
  func.func @transform_1(%arg0: i32) -> (i32, i32) {
    %c0_i32 = arith.constant 0 : i32
    %c0_i32_0 = arith.constant 0 : i32
    %c0_i32_1 = arith.constant 0 : i32
    return %c0_i32, %c0_i32_0 : i32, i32
  }
  func.func @transform_2(%arg0: i32) -> (i32, i32) {
    %c0_i32 = arith.constant 0 : i32
    %c0_i32_0 = arith.constant 0 : i32
    %c0_i32_1 = arith.constant 0 : i32
    return %c0_i32, %c0_i32_0 : i32, i32
  }
  func.func @transform_3(%arg0: i32) -> (i32, i32) {
    %c0_i32 = arith.constant 0 : i32
    %c0_i32_0 = arith.constant 0 : i32
    %c0_i32_1 = arith.constant 0 : i32
    return %c0_i32, %c0_i32_0 : i32, i32
  }
  func.func @transform_4(%arg0: i32) -> (i32, i32) {
    %c0_i32 = arith.constant 0 : i32
    %c0_i32_0 = arith.constant 0 : i32
    %c0_i32_1 = arith.constant 0 : i32
    return %c0_i32, %c0_i32_0 : i32, i32
  }
  func.func @transform_5(%arg0: i32) -> (i32, i32) {
    %c0_i32 = arith.constant 0 : i32
    %c0_i32_0 = arith.constant 0 : i32
    %c0_i32_1 = arith.constant 0 : i32
    return %c0_i32, %c0_i32_0 : i32, i32
  }
  func.func @transform_6(%arg0: i32) -> (i32, i32) {
    %c0_i32 = arith.constant 0 : i32
    %c0_i32_0 = arith.constant 0 : i32
    %c0_i32_1 = arith.constant 0 : i32
    return %c0_i32, %c0_i32_0 : i32, i32
  }
  func.func @transform_7(%arg0: i32) -> (i32, i32) {
    %c0_i32 = arith.constant 0 : i32
    %c0_i32_0 = arith.constant 0 : i32
    %c0_i32_1 = arith.constant 0 : i32
    return %c0_i32, %c0_i32_0 : i32, i32
  }
  func.func @transform_8(%arg0: i32) -> (i32, i32) {
    %c0_i32 = arith.constant 0 : i32
    %c0_i32_0 = arith.constant 0 : i32
    %c0_i32_1 = arith.constant 0 : i32
    return %c0_i32, %c0_i32_0 : i32, i32
  }
  func.func @transform_9(%arg0: i32) -> (i32, i32) {
    %c0_i32 = arith.constant 0 : i32
    %c0_i32_0 = arith.constant 0 : i32
    %c0_i32_1 = arith.constant 0 : i32
    return %c0_i32, %c0_i32_0 : i32, i32
  }
  func.func @transform_10(%arg0: i32) -> (i32, i32) {
    %c0_i32 = arith.constant 0 : i32
    %c0_i32_0 = arith.constant 0 : i32
    %c0_i32_1 = arith.constant 0 : i32
    return %c0_i32, %c0_i32_0 : i32, i32
  }
  func.func @transform_11(%arg0: i32) -> (i32, i32) {
    %c0_i32 = arith.constant 0 : i32
    %c0_i32_0 = arith.constant 0 : i32
    %c0_i32_1 = arith.constant 0 : i32
    return %c0_i32, %c0_i32_0 : i32, i32
  }
  func.func @transform_12(%arg0: i32) -> (i32, i32) {
    %c0_i32 = arith.constant 0 : i32
    %c0_i32_0 = arith.constant 0 : i32
    %c0_i32_1 = arith.constant 0 : i32
    return %c0_i32, %c0_i32_0 : i32, i32
  }
  func.func @transform_13(%arg0: i32) -> (i32, i32) {
    %c0_i32 = arith.constant 0 : i32
    %c0_i32_0 = arith.constant 0 : i32
    return %arg0, %c0_i32 : i32, i32
  }
}

</mosaic_0001>

<llo_original>
// kernel: tpu_custom_call.1
$region0: #{tpu_custom_call.1}
  #allocation0 [shape = 'u32[]', space=smem, size = 0x4, offset = 0x4, fixed_abs, tag = 'smem constant byte address 0x4 - core index']
  #allocation1 [shape = 'u32[144,128]{1,0:T(1,128)}', space=vmem, size = 0x12000, scoped, tag = 'internal scratch']
  %s0 = inlined_call_operand.vmem [shape: f32[8,16], index: 0, kind: input, shape index: {}]
  %s1 = inlined_call_operand.hbm [shape: f32[16,64], index: 1, kind: input, shape index: {}]
  %s2 = inlined_call_operand.hbm [shape: f32[1,32], index: 2, kind: input, shape index: {}]
  %s3 = inlined_call_operand.vmem [shape: f32[32,32], index: 3, kind: input, shape index: {}]
  %s4 = inlined_call_operand.hbm [shape: f32[1,32], index: 4, kind: input, shape index: {}]
  %s5 = inlined_call_operand.vmem [shape: f32[32,4], index: 5, kind: input, shape index: {}]
  %s6 = inlined_call_operand.hbm [shape: f32[1,4], index: 6, kind: input, shape index: {}]
  %s7 = inlined_call_operand.vmem [shape: f32[4,32], index: 7, kind: input, shape index: {}]
  %s8 = inlined_call_operand.vmem [shape: f32[1,32], index: 8, kind: input, shape index: {}]
  %s9 = inlined_call_operand.vmem [shape: f32[32,32], index: 9, kind: input, shape index: {}]
  %s10 = inlined_call_operand.vmem [shape: f32[1,32], index: 10, kind: input, shape index: {}]
  %s11 = inlined_call_operand.vmem [shape: f32[32,6], index: 11, kind: input, shape index: {}]
  %s12 = inlined_call_operand.vmem [shape: f32[1,6], index: 12, kind: input, shape index: {}]
  %s13 = inlined_call_operand.hbm [shape: f32[8,128], index: 13, kind: output, shape index: {}]
  %s14 = sld [smem:[#allocation0]]
  $region78: #{tpu_custom_call.1} parent=0
    _
  %s16 = ssub.s32 1, %s14
  %s17 = scalar_select 0, %s16, %s14
  $region1: #{tpu_custom_call.1} parent=0
    #allocation2 [shape = 'u8[8192]{0}', space=vmem, size = 0x2000, scoped, tag = 'input window, operand 1, single buffered']
    #allocation3 [shape = 's32[1]{0}', space=sflag, size = 0x4, scoped, tag = 'scoped memory for tpu_custom_call.1']
    #allocation4 [shape = 's32[1]{0}', space=sflag, size = 0x4, scoped, tag = 'scoped memory for tpu_custom_call.1']
    #allocation5 [shape = 'u8[512]{0}', space=vmem, size = 0x400, scoped, tag = 'input window, operand 2, single buffered']
    #allocation6 [shape = 's32[1]{0}', space=sflag, size = 0x4, scoped, tag = 'scoped memory for tpu_custom_call.1']
    #allocation7 [shape = 'u8[512]{0}', space=vmem, size = 0x400, scoped, tag = 'input window, operand 4, single buffered']
    #allocation8 [shape = 'u8[512]{0}', space=vmem, size = 0x400, scoped, tag = 'input window, operand 6, single buffered']
    #allocation9 [shape = 's32[1]{0}', space=sflag, size = 0x4, scoped, tag = 'scoped memory for tpu_custom_call.1']
    #allocation10 [shape = 'u8[4096]{0}', space=vmem, size = 0x1000, scoped, tag = 'output window, operand 0, single buffered']
    %18 = vsyncpa [#allocation3], 0
    %19 = vsyncpa [#allocation6], 0
    %20 = vsyncpa [#allocation9], 0
    %21 = vsyncpa [#allocation4], 0
    // Predicated region
    $region2: #{tpu_custom_call.1} parent=1 // pred_check
      _
    $region3: #{tpu_custom_call.1} parent=1 // pred_check_branch
      %23 = sbr.rel (0) target = $region5
    $region4: #{tpu_custom_call.1} parent=1 // pred_region
      _
    $region5: #{tpu_custom_call.1} parent=1 // pred_fallthru
      _
    // Predicated region
    $region6: #{tpu_custom_call.1} parent=1 // pred_check
      _
    $region7: #{tpu_custom_call.1} parent=1 // pred_check_branch
      %25 = sbr.rel (0) target = $region9
    $region8: #{tpu_custom_call.1} parent=1 // pred_region
      %s27 = ssub.s32 256, 256
      %28 = vsyncadd [#allocation3], %s27
      %s29 = sshll.u32 [#allocation2], 4
      %s30 = int_to_ptr.vmem [resolvable:$true] %s29
      %35 = dma.hbm_to_vmem [thread:$0]  %s1, 256, %s30, [#allocation3], 128, 128, 8
    $region9: #{tpu_custom_call.1} parent=1 // pred_fallthru
      _
    // Predicated region
    $region10: #{tpu_custom_call.1} parent=1 // pred_check
      _
    $region11: #{tpu_custom_call.1} parent=1 // pred_check_branch
      %37 = sbr.rel (0) target = $region13
    $region12: #{tpu_custom_call.1} parent=1 // pred_region
      %s39 = ssub.s32 16, 16
      %40 = vsyncadd [#allocation6], %s39
      %s42 = sshll.u32 [#allocation5], 4
      %s43 = int_to_ptr.vmem [resolvable:$true] %s42
      %45 = dma.hbm_to_vmem [thread:$0]  %s2, 16, %s43, [#allocation6]
    $region13: #{tpu_custom_call.1} parent=1 // pred_fallthru
      _
    // Predicated region
    $region14: #{tpu_custom_call.1} parent=1 // pred_check
      _
    $region15: #{tpu_custom_call.1} parent=1 // pred_check_branch
      %47 = sbr.rel (0) target = $region17
    $region16: #{tpu_custom_call.1} parent=1 // pred_region
      _
    $region17: #{tpu_custom_call.1} parent=1 // pred_fallthru
      _
    // Predicated region
    $region18: #{tpu_custom_call.1} parent=1 // pred_check
      _
    $region19: #{tpu_custom_call.1} parent=1 // pred_check_branch
      %49 = sbr.rel (0) target = $region21
    $region20: #{tpu_custom_call.1} parent=1 // pred_region
      %s51 = ssub.s32 16, 16
      %52 = vsyncadd [#allocation6], %s51
      %s54 = sshll.u32 [#allocation7], 4
      %s55 = int_to_ptr.vmem [resolvable:$true] %s54
      %57 = dma.hbm_to_vmem [thread:$0]  %s4, 16, %s55, [#allocation6]
    $region21: #{tpu_custom_call.1} parent=1 // pred_fallthru
      _
    // Predicated region
    $region22: #{tpu_custom_call.1} parent=1 // pred_check
      _
    $region23: #{tpu_custom_call.1} parent=1 // pred_check_branch
      %59 = sbr.rel (0) target = $region25
    $region24: #{tpu_custom_call.1} parent=1 // pred_region
      _
    $region25: #{tpu_custom_call.1} parent=1 // pred_fallthru
      _
    // Predicated region
    $region26: #{tpu_custom_call.1} parent=1 // pred_check
      _
    $region27: #{tpu_custom_call.1} parent=1 // pred_check_branch
      %61 = sbr.rel (0) target = $region29
    $region28: #{tpu_custom_call.1} parent=1 // pred_region
      %s63 = ssub.s32 16, 16
      %64 = vsyncadd [#allocation9], %s63
      %s66 = sshll.u32 [#allocation8], 4
      %s67 = int_to_ptr.vmem [resolvable:$true] %s66
      %69 = dma.hbm_to_vmem [thread:$0]  %s6, 16, %s67, [#allocation9]
    $region29: #{tpu_custom_call.1} parent=1 // pred_fallthru
      _
    // Predicated region
    $region30: #{tpu_custom_call.1} parent=1 // pred_check
      _
    $region31: #{tpu_custom_call.1} parent=1 // pred_check_branch
      %71 = sbr.rel (0) target = $region33
    $region32: #{tpu_custom_call.1} parent=1 // pred_region
      _
    $region33: #{tpu_custom_call.1} parent=1 // pred_fallthru
      _
    // Predicated region
    $region34: #{tpu_custom_call.1} parent=1 // pred_check
      _
    $region35: #{tpu_custom_call.1} parent=1 // pred_check_branch
      %73 = sbr.rel (0) target = $region37
    $region36: #{tpu_custom_call.1} parent=1 // pred_region
      _
    $region37: #{tpu_custom_call.1} parent=1 // pred_fallthru
      _
    // Predicated region
    $region38: #{tpu_custom_call.1} parent=1 // pred_check
      _
    $region39: #{tpu_custom_call.1} parent=1 // pred_check_branch
      %75 = sbr.rel (0) target = $region41
    $region40: #{tpu_custom_call.1} parent=1 // pred_region
      _
    $region41: #{tpu_custom_call.1} parent=1 // pred_fallthru
      _
    // Predicated region
    $region42: #{tpu_custom_call.1} parent=1 // pred_check
      _
    $region43: #{tpu_custom_call.1} parent=1 // pred_check_branch
      %77 = sbr.rel (0) target = $region45
    $region44: #{tpu_custom_call.1} parent=1 // pred_region
      _
    $region45: #{tpu_custom_call.1} parent=1 // pred_fallthru
      _
    // Predicated region
    $region46: #{tpu_custom_call.1} parent=1 // pred_check
      _
    $region47: #{tpu_custom_call.1} parent=1 // pred_check_branch
      %79 = sbr.rel (0) target = $region49
    $region48: #{tpu_custom_call.1} parent=1 // pred_region
      _
    $region49: #{tpu_custom_call.1} parent=1 // pred_fallthru
      _
    // Predicated region
    $region50: #{tpu_custom_call.1} parent=1 // pred_check
      _
    $region51: #{tpu_custom_call.1} parent=1 // pred_check_branch
      %81 = sbr.rel (0) target = $region53
    $region52: #{tpu_custom_call.1} parent=1 // pred_region
      _
    $region53: #{tpu_custom_call.1} parent=1 // pred_fallthru
      _
    // Predicated region
    $region54: #{tpu_custom_call.1} parent=1 // pred_check
      _
    $region55: #{tpu_custom_call.1} parent=1 // pred_check_branch
      %83 = sbr.rel (0) target = $region57
    $region56: #{tpu_custom_call.1} parent=1 // pred_region
      %84 = dma.done [#allocation3], 256
    $region57: #{tpu_custom_call.1} parent=1 // pred_fallthru
      _
    // Predicated region
    $region58: #{tpu_custom_call.1} parent=1 // pred_check
      _
    $region59: #{tpu_custom_call.1} parent=1 // pred_check_branch
      %86 = sbr.rel (0) target = $region61
    $region60: #{tpu_custom_call.1} parent=1 // pred_region
      %87 = dma.done [#allocation6], 16
    $region61: #{tpu_custom_call.1} parent=1 // pred_fallthru
      _
    // Predicated region
    $region62: #{tpu_custom_call.1} parent=1 // pred_check
      _
    $region63: #{tpu_custom_call.1} parent=1 // pred_check_branch
      %89 = sbr.rel (0) target = $region65
    $region64: #{tpu_custom_call.1} parent=1 // pred_region
      %90 = dma.done [#allocation6], 16
    $region65: #{tpu_custom_call.1} parent=1 // pred_fallthru
      _
    // Predicated region
    $region66: #{tpu_custom_call.1} parent=1 // pred_check
      _
    $region67: #{tpu_custom_call.1} parent=1 // pred_check_branch
      %92 = sbr.rel (0) target = $region69
    $region68: #{tpu_custom_call.1} parent=1 // pred_region
      %93 = dma.done [#allocation9], 16
    $region69: #{tpu_custom_call.1} parent=1 // pred_fallthru
      _
    %v94 = vld [vmem:[%s0] sm:$0xff]
    %v95 = vld [vmem:[#allocation2] sm:$0xff]
    %v96 = vld [vmem:[#allocation2 + $0x8] sm:$0xff]
    %vm97 = vcmask 130048
    %v99 = vsel %vm97, %v94, 0
    %101 = vmatprep.subr.mxu0 0.0
    %102 = vmatpush1.msra.mxu0 0.0
    %103 = vmatprep.subr.mxu0 0.0
    %104 = vmatpush1.msra.mxu0 0.0
    %105 = vmatprep.subr.mxu0 0.0
    %106 = vmatpush1.msra.mxu0 0.0
    %107 = vmatprep.subr.mxu0 0.0
    %108 = vmatpush1.msra.mxu0 0.0
    %109 = vmatprep.subr.mxu0 0.0
    %110 = vmatpush1.msra.mxu0 0.0
    %111 = vmatprep.subr.mxu0 0.0
    %112 = vmatpush1.msra.mxu0 0.0
    %113 = vmatprep.subr.mxu0 0.0
    %114 = vmatpush1.msra.mxu0 0.0
    %115 = vmatprep.subr.mxu0 0.0
    %116 = vmatpush1.msra.mxu0 0.0
    %117 = vmatprep.subr.mxu0 0.0
    %118 = vmatpush1.msra.mxu0 0.0
    %119 = vmatprep.subr.mxu0 0.0
    %120 = vmatpush1.msra.mxu0 0.0
    %121 = vmatprep.subr.mxu0 0.0
    %122 = vmatpush1.msra.mxu0 0.0
    %123 = vmatprep.subr.mxu0 0.0
    %124 = vmatpush1.msra.mxu0 0.0
    %125 = vmatprep.subr.mxu0 0.0
    %126 = vmatpush1.msra.mxu0 0.0
    %127 = vmatprep.subr.mxu0 0.0
    %128 = vmatpush1.msra.mxu0 0.0
    %129 = vmatprep.subr.mxu0 0.0
    %130 = vmatpush1.msra.mxu0 %v96
    %131 = vmatprep.subr.mxu0 0.0
    %132 = vmatpush1.msra.mxu0 %v95
    %133 = vmatprep.subr.mxu0 0.0
    %134 = vmatpush2.msra.mxu0 0.0
    %135 = vmatprep.subr.mxu0 0.0
    %136 = vmatpush2.msra.mxu0 0.0
    %137 = vmatprep.subr.mxu0 0.0
    %138 = vmatpush2.msra.mxu0 0.0
    %139 = vmatprep.subr.mxu0 0.0
    %140 = vmatpush2.msra.mxu0 0.0
    %141 = vmatprep.subr.mxu0 0.0
    %142 = vmatpush2.msra.mxu0 0.0
    %143 = vmatprep.subr.mxu0 0.0
    %144 = vmatpush2.msra.mxu0 0.0
    %145 = vmatprep.subr.mxu0 0.0
    %146 = vmatpush2.msra.mxu0 0.0
    %147 = vmatprep.subr.mxu0 0.0
    %148 = vmatpush2.msra.mxu0 0.0
    %149 = vmatprep.subr.mxu0 0.0
    %150 = vmatpush2.msra.mxu0 0.0
    %151 = vmatprep.subr.mxu0 0.0
    %152 = vmatpush2.msra.mxu0 0.0
    %153 = vmatprep.subr.mxu0 0.0
    %154 = vmatpush2.msra.mxu0 0.0
    %155 = vmatprep.subr.mxu0 0.0
    %156 = vmatpush2.msra.mxu0 0.0
    %157 = vmatprep.subr.mxu0 0.0
    %158 = vmatpush2.msra.mxu0 0.0
    %159 = vmatprep.subr.mxu0 0.0
    %160 = vmatpush2.msra.mxu0 0.0
    %161 = vmatprep.subr.mxu0 0.0
    %162 = vmatpush2.msra.mxu0 0.0
    %163 = vmatprep.subr.mxu0 0.0
    %164 = vmatpush2.msra.mxu0 0.0
    %165 = vmatprep.mubr.f32.mxu0 0.0
    %166 = vmatmul.mubr.f32.gmra.mxu0 %v99
    %v167 = vpop.f32.mrf.mxu0
    %v168 = vadd.f32 0.0, %v167
    %v169 = vpop.f32.mrf.mxu0
    %170 = vdwg.mxu0
    %v171 = vld [vmem:[#allocation5] sm:$0x1]
    %v173 = vlaneseq
    %v174 = vshrl.u32 %v173, 7
    %v175 = vsub.s32 0, %v174
    %v176 = vrot.slane %v171, %v175
    %v178 = vadd.f32 %v168, %v176
    %v179 = vtanh.pop %v178
    %v180 = vld [vmem:[%s3] sm:$0xff]
    %v181 = vld [vmem:[%s3 + $0x8] sm:$0xff]
    %v182 = vld [vmem:[%s3 + $0x10] sm:$0xff]
    %v183 = vld [vmem:[%s3 + $0x18] sm:$0xff]
    %v184 = vld [vmem:[#allocation7] sm:$0x1]
    %v186 = vlaneseq
    %v187 = vshrl.u32 %v186, 7
    %v188 = vsub.s32 0, %v187
    %v189 = vrot.slane %v184, %v188
    %vm191 = vcmask 261120
    %v193 = vsel %vm191, %v179, 0
    %195 = vmatprep.subr.mxu0 0.0
    %196 = vmatpush1.msra.mxu0 0.0
    %197 = vmatprep.subr.mxu0 0.0
    %198 = vmatpush1.msra.mxu0 0.0
    %199 = vmatprep.subr.mxu0 0.0
    %200 = vmatpush1.msra.mxu0 0.0
    %201 = vmatprep.subr.mxu0 0.0
    %202 = vmatpush1.msra.mxu0 0.0
    %203 = vmatprep.subr.mxu0 0.0
    %204 = vmatpush1.msra.mxu0 0.0
    %205 = vmatprep.subr.mxu0 0.0
    %206 = vmatpush1.msra.mxu0 0.0
    %207 = vmatprep.subr.mxu0 0.0
    %208 = vmatpush1.msra.mxu0 0.0
    %209 = vmatprep.subr.mxu0 0.0
    %210 = vmatpush1.msra.mxu0 0.0
    %211 = vmatprep.subr.mxu0 0.0
    %212 = vmatpush1.msra.mxu0 0.0
    %213 = vmatprep.subr.mxu0 0.0
    %214 = vmatpush1.msra.mxu0 0.0
    %215 = vmatprep.subr.mxu0 0.0
    %216 = vmatpush1.msra.mxu0 0.0
    %217 = vmatprep.subr.mxu0 0.0
    %218 = vmatpush1.msra.mxu0 0.0
    %219 = vmatprep.subr.mxu0 0.0
    %220 = vmatpush1.msra.mxu0 %v183
    %221 = vmatprep.subr.mxu0 0.0
    %222 = vmatpush1.msra.mxu0 %v182
    %223 = vmatprep.subr.mxu0 0.0
    %224 = vmatpush1.msra.mxu0 %v181
    %225 = vmatprep.subr.mxu0 0.0
    %226 = vmatpush1.msra.mxu0 %v180
    %227 = vmatprep.subr.mxu0 0.0
    %228 = vmatpush2.msra.mxu0 0.0
    %229 = vmatprep.subr.mxu0 0.0
    %230 = vmatpush2.msra.mxu0 0.0
    %231 = vmatprep.subr.mxu0 0.0
    %232 = vmatpush2.msra.mxu0 0.0
    %233 = vmatprep.subr.mxu0 0.0
    %234 = vmatpush2.msra.mxu0 0.0
    %235 = vmatprep.subr.mxu0 0.0
    %236 = vmatpush2.msra.mxu0 0.0
    %237 = vmatprep.subr.mxu0 0.0
    %238 = vmatpush2.msra.mxu0 0.0
    %239 = vmatprep.subr.mxu0 0.0
    %240 = vmatpush2.msra.mxu0 0.0
    %241 = vmatprep.subr.mxu0 0.0
    %242 = vmatpush2.msra.mxu0 0.0
    %243 = vmatprep.subr.mxu0 0.0
    %244 = vmatpush2.msra.mxu0 0.0
    %245 = vmatprep.subr.mxu0 0.0
    %246 = vmatpush2.msra.mxu0 0.0
    %247 = vmatprep.subr.mxu0 0.0
    %248 = vmatpush2.msra.mxu0 0.0
    %249 = vmatprep.subr.mxu0 0.0
    %250 = vmatpush2.msra.mxu0 0.0
    %251 = vmatprep.subr.mxu0 0.0
    %252 = vmatpush2.msra.mxu0 0.0
    %253 = vmatprep.subr.mxu0 0.0
    %254 = vmatpush2.msra.mxu0 0.0
    %255 = vmatprep.subr.mxu0 0.0
    %256 = vmatpush2.msra.mxu0 0.0
    %257 = vmatprep.subr.mxu0 0.0
    %258 = vmatpush2.msra.mxu0 0.0
    %259 = vmatprep.mubr.f32.mxu0 0.0
    %260 = vmatmul.mubr.f32.gmra.mxu0 %v193
    %v261 = vpop.f32.mrf.mxu0
    %v262 = vadd.f32 %v189, %v261
    %v263 = vpop.f32.mrf.mxu0
    %264 = vdwg.mxu0
    %v265 = vtanh.pop %v262
    %v266 = vld [vmem:[%s5] sm:$0xff]
    %v267 = vld [vmem:[%s5 + $0x8] sm:$0xff]
    %v268 = vld [vmem:[%s5 + $0x10] sm:$0xff]
    %v269 = vld [vmem:[%s5 + $0x18] sm:$0xff]
    %v270 = vld [vmem:[#allocation8] sm:$0x1]
    %v272 = vlaneseq
    %v273 = vshrl.u32 %v272, 7
    %v274 = vsub.s32 0, %v273
    %v275 = vrot.slane %v270, %v274
    %v278 = vsel %vm191, %v265, 0
    %280 = vmatprep.subr.mxu0 0.0
    %281 = vmatpush1.msra.mxu0 0.0
    %282 = vmatprep.subr.mxu0 0.0
    %283 = vmatpush1.msra.mxu0 0.0
    %284 = vmatprep.subr.mxu0 0.0
    %285 = vmatpush1.msra.mxu0 0.0
    %286 = vmatprep.subr.mxu0 0.0
    %287 = vmatpush1.msra.mxu0 0.0
    %288 = vmatprep.subr.mxu0 0.0
    %289 = vmatpush1.msra.mxu0 0.0
    %290 = vmatprep.subr.mxu0 0.0
    %291 = vmatpush1.msra.mxu0 0.0
    %292 = vmatprep.subr.mxu0 0.0
    %293 = vmatpush1.msra.mxu0 0.0
    %294 = vmatprep.subr.mxu0 0.0
    %295 = vmatpush1.msra.mxu0 0.0
    %296 = vmatprep.subr.mxu0 0.0
    %297 = vmatpush1.msra.mxu0 0.0
    %298 = vmatprep.subr.mxu0 0.0
    %299 = vmatpush1.msra.mxu0 0.0
    %300 = vmatprep.subr.mxu0 0.0
    %301 = vmatpush1.msra.mxu0 0.0
    %302 = vmatprep.subr.mxu0 0.0
    %303 = vmatpush1.msra.mxu0 0.0
    %304 = vmatprep.subr.mxu0 0.0
    %305 = vmatpush1.msra.mxu0 %v269
    %306 = vmatprep.subr.mxu0 0.0
    %307 = vmatpush1.msra.mxu0 %v268
    %308 = vmatprep.subr.mxu0 0.0
    %309 = vmatpush1.msra.mxu0 %v267
    %310 = vmatprep.subr.mxu0 0.0
    %311 = vmatpush1.msra.mxu0 %v266
    %312 = vmatprep.subr.mxu0 0.0
    %313 = vmatpush2.msra.mxu0 0.0
    %314 = vmatprep.subr.mxu0 0.0
    %315 = vmatpush2.msra.mxu0 0.0
    %316 = vmatprep.subr.mxu0 0.0
    %317 = vmatpush2.msra.mxu0 0.0
    %318 = vmatprep.subr.mxu0 0.0
    %319 = vmatpush2.msra.mxu0 0.0
    %320 = vmatprep.subr.mxu0 0.0
    %321 = vmatpush2.msra.mxu0 0.0
    %322 = vmatprep.subr.mxu0 0.0
    %323 = vmatpush2.msra.mxu0 0.0
    %324 = vmatprep.subr.mxu0 0.0
    %325 = vmatpush2.msra.mxu0 0.0
    %326 = vmatprep.subr.mxu0 0.0
    %327 = vmatpush2.msra.mxu0 0.0
    %328 = vmatprep.subr.mxu0 0.0
    %329 = vmatpush2.msra.mxu0 0.0
    %330 = vmatprep.subr.mxu0 0.0
    %331 = vmatpush2.msra.mxu0 0.0
    %332 = vmatprep.subr.mxu0 0.0
    %333 = vmatpush2.msra.mxu0 0.0
    %334 = vmatprep.subr.mxu0 0.0
    %335 = vmatpush2.msra.mxu0 0.0
    %336 = vmatprep.subr.mxu0 0.0
    %337 = vmatpush2.msra.mxu0 0.0
    %338 = vmatprep.subr.mxu0 0.0
    %339 = vmatpush2.msra.mxu0 0.0
    %340 = vmatprep.subr.mxu0 0.0
    %341 = vmatpush2.msra.mxu0 0.0
    %342 = vmatprep.subr.mxu0 0.0
    %343 = vmatpush2.msra.mxu0 0.0
    %344 = vmatprep.mubr.f32.mxu0 0.0
    %345 = vmatmul.mubr.f32.gmra.mxu0 %v278
    %v346 = vpop.f32.mrf.mxu0
    %v347 = vadd.f32 %v275, %v346
    %v348 = vpop.f32.mrf.mxu0
    %349 = vdwg.mxu0
    %vm350 = vcmask 31744
    %v351 = vsel %vm350, %v347, -inf
    %352 = vmax.xlane.f32.xlu0 %v351
    %v353 = vpop.xlane.xlu0 %352
    %v354 = vsub.f32 %v347, %v353
    %v355 = vmul.f32 %v354, 1.442695
    %v356 = vpow.pop %v355
    %v357 = vsel %vm350, %v356, 0.0
    %358 = vadd.xlane.f32.xlu0 %v357
    %v359 = vpop.xlane.xlu0 %358
    %v360 = vrcp.pop %v359
    %v361 = vmul.f32 %v356, %v360
    %v362 = vlaneseq
    %v363 = vand.u32 %v362, 127
    %vm364 = vcmp.eq.f32.partialorder %v347, %v353
    %v365 = vsel %vm364, %v363, 4
    %v366 = vsel %vm350, %v365, 2147483647
    %v367 = vand.u32 %v366, 65535
    %v368 = vshra.s32 %v366, 16
    %v369 = vcvt.s32.f32 %v367
    %v370 = vcvt.s32.f32 %v368
    %371 = vmin.xlane.f32.xlu0 %v370
    %v372 = vpop.xlane.xlu0 %371
    %vm373 = vcmp.eq.f32.partialorder %v370, %v372
    %v374 = vsel %vm373, %v369, inf
    %375 = vmin.xlane.f32.xlu0 %v374
    %v376 = vpop.xlane.xlu0 %375
    %v377 = vcvt.f32.s32 %v376
    %v378 = vcvt.f32.s32 %v372
    %v379 = vshll.u32 %v378, 16
    %v380 = vadd.s32 %v379, %v377
    %vm381 = vcmp.eq.s32.totalorder %v363, %v380
    %v382 = vsel %vm381, 1, 0
    %v383 = vcvt.s32.f32 %v382
    %v384 = vld [vmem:[%s7] sm:$0xf]
    %v386 = vsel %vm350, %v383, 0
    %vm388 = vcmask 1043456
    %v390 = vsel %vm388, %v384, 0
    %392 = vmatprep.subr.mxu0 0.0
    %393 = vmatpush1.msra.mxu0 0.0
    %394 = vmatprep.subr.mxu0 0.0
    %395 = vmatpush1.msra.mxu0 0.0
    %396 = vmatprep.subr.mxu0 0.0
    %397 = vmatpush1.msra.mxu0 0.0
    %398 = vmatprep.subr.mxu0 0.0
    %399 = vmatpush1.msra.mxu0 0.0
    %400 = vmatprep.subr.mxu0 0.0
    %401 = vmatpush1.msra.mxu0 0.0
    %402 = vmatprep.subr.mxu0 0.0
    %403 = vmatpush1.msra.mxu0 0.0
    %404 = vmatprep.subr.mxu0 0.0
    %405 = vmatpush1.msra.mxu0 0.0
    %406 = vmatprep.subr.mxu0 0.0
    %407 = vmatpush1.msra.mxu0 0.0
    %408 = vmatprep.subr.mxu0 0.0
    %409 = vmatpush1.msra.mxu0 0.0
    %410 = vmatprep.subr.mxu0 0.0
    %411 = vmatpush1.msra.mxu0 0.0
    %412 = vmatprep.subr.mxu0 0.0
    %413 = vmatpush1.msra.mxu0 0.0
    %414 = vmatprep.subr.mxu0 0.0
    %415 = vmatpush1.msra.mxu0 0.0
    %416 = vmatprep.subr.mxu0 0.0
    %417 = vmatpush1.msra.mxu0 0.0
    %418 = vmatprep.subr.mxu0 0.0
    %419 = vmatpush1.msra.mxu0 0.0
    %420 = vmatprep.subr.mxu0 0.0
    %421 = vmatpush1.msra.mxu0 0.0
    %422 = vmatprep.subr.mxu0 0.0
    %423 = vmatpush1.msra.mxu0 %v390
    %424 = vmatprep.subr.mxu0 0.0
    %425 = vmatpush2.msra.mxu0 0.0
    %426 = vmatprep.subr.mxu0 0.0
    %427 = vmatpush2.msra.mxu0 0.0
    %428 = vmatprep.subr.mxu0 0.0
    %429 = vmatpush2.msra.mxu0 0.0
    %430 = vmatprep.subr.mxu0 0.0
    %431 = vmatpush2.msra.mxu0 0.0
    %432 = vmatprep.subr.mxu0 0.0
    %433 = vmatpush2.msra.mxu0 0.0
    %434 = vmatprep.subr.mxu0 0.0
    %435 = vmatpush2.msra.mxu0 0.0
    %436 = vmatprep.subr.mxu0 0.0
    %437 = vmatpush2.msra.mxu0 0.0
    %438 = vmatprep.subr.mxu0 0.0
    %439 = vmatpush2.msra.mxu0 0.0
    %440 = vmatprep.subr.mxu0 0.0
    %441 = vmatpush2.msra.mxu0 0.0
    %442 = vmatprep.subr.mxu0 0.0
    %443 = vmatpush2.msra.mxu0 0.0
    %444 = vmatprep.subr.mxu0 0.0
    %445 = vmatpush2.msra.mxu0 0.0
    %446 = vmatprep.subr.mxu0 0.0
    %447 = vmatpush2.msra.mxu0 0.0
    %448 = vmatprep.subr.mxu0 0.0
    %449 = vmatpush2.msra.mxu0 0.0
    %450 = vmatprep.subr.mxu0 0.0
    %451 = vmatpush2.msra.mxu0 0.0
    %452 = vmatprep.subr.mxu0 0.0
    %453 = vmatpush2.msra.mxu0 0.0
    %454 = vmatprep.subr.mxu0 0.0
    %455 = vmatpush2.msra.mxu0 0.0
    %456 = vmatprep.mubr.f32.mxu0 0.0
    %457 = vmatmul.mubr.f32.gmra.mxu0 %v386
    %v458 = vpop.f32.mrf.mxu0
    %v459 = vadd.f32 0.0, %v458
    %v460 = vpop.f32.mrf.mxu0
    %461 = vdwg.mxu0
    %463 = vrot.lane.b32.xlu0 %v459, 32
    %v464 = vpop.permute.xlu0 %463
    %v466 = vadd.f32 %v168, %v464
    %v467 = vld [vmem:[%s8] sm:$0x1]
    %v469 = vlaneseq
    %v470 = vshrl.u32 %v469, 7
    %v471 = vsub.s32 0, %v470
    %v472 = vrot.slane %v467, %v471
    %473 = vrot.lane.b32.xlu0 %v472, 32
    %v474 = vpop.permute.xlu0 %473
    %v476 = vadd.f32 %v466, %v474
    %v477 = vtanh.pop %v476
    %v478 = vld [vmem:[%s9] sm:$0xff]
    %v479 = vld [vmem:[%s9 + $0x8] sm:$0xff]
    %v480 = vld [vmem:[%s9 + $0x10] sm:$0xff]
    %v481 = vld [vmem:[%s9 + $0x18] sm:$0xff]
    %v482 = vld [vmem:[%s10] sm:$0x1]
    %v484 = vlaneseq
    %v485 = vshrl.u32 %v484, 7
    %v486 = vsub.s32 0, %v485
    %v487 = vrot.slane %v482, %v486
    %490 = vrot.lane.b32.xlu0 %v477, 96
    %v491 = vpop.permute.xlu0 %490
    %v492 = vsel %vm191, %v491, 0
    %494 = vmatprep.subr.mxu0 0.0
    %495 = vmatpush1.msra.mxu0 0.0
    %496 = vmatprep.subr.mxu0 0.0
    %497 = vmatpush1.msra.mxu0 0.0
    %498 = vmatprep.subr.mxu0 0.0
    %499 = vmatpush1.msra.mxu0 0.0
    %500 = vmatprep.subr.mxu0 0.0
    %501 = vmatpush1.msra.mxu0 0.0
    %502 = vmatprep.subr.mxu0 0.0
    %503 = vmatpush1.msra.mxu0 0.0
    %504 = vmatprep.subr.mxu0 0.0
    %505 = vmatpush1.msra.mxu0 0.0
    %506 = vmatprep.subr.mxu0 0.0
    %507 = vmatpush1.msra.mxu0 0.0
    %508 = vmatprep.subr.mxu0 0.0
    %509 = vmatpush1.msra.mxu0 0.0
    %510 = vmatprep.subr.mxu0 0.0
    %511 = vmatpush1.msra.mxu0 0.0
    %512 = vmatprep.subr.mxu0 0.0
    %513 = vmatpush1.msra.mxu0 0.0
    %514 = vmatprep.subr.mxu0 0.0
    %515 = vmatpush1.msra.mxu0 0.0
    %516 = vmatprep.subr.mxu0 0.0
    %517 = vmatpush1.msra.mxu0 0.0
    %518 = vmatprep.subr.mxu0 0.0
    %519 = vmatpush1.msra.mxu0 %v481
    %520 = vmatprep.subr.mxu0 0.0
    %521 = vmatpush1.msra.mxu0 %v480
    %522 = vmatprep.subr.mxu0 0.0
    %523 = vmatpush1.msra.mxu0 %v479
    %524 = vmatprep.subr.mxu0 0.0
    %525 = vmatpush1.msra.mxu0 %v478
    %526 = vmatprep.subr.mxu0 0.0
    %527 = vmatpush2.msra.mxu0 0.0
    %528 = vmatprep.subr.mxu0 0.0
    %529 = vmatpush2.msra.mxu0 0.0
    %530 = vmatprep.subr.mxu0 0.0
    %531 = vmatpush2.msra.mxu0 0.0
    %532 = vmatprep.subr.mxu0 0.0
    %533 = vmatpush2.msra.mxu0 0.0
    %534 = vmatprep.subr.mxu0 0.0
    %535 = vmatpush2.msra.mxu0 0.0
    %536 = vmatprep.subr.mxu0 0.0
    %537 = vmatpush2.msra.mxu0 0.0
    %538 = vmatprep.subr.mxu0 0.0
    %539 = vmatpush2.msra.mxu0 0.0
    %540 = vmatprep.subr.mxu0 0.0
    %541 = vmatpush2.msra.mxu0 0.0
    %542 = vmatprep.subr.mxu0 0.0
    %543 = vmatpush2.msra.mxu0 0.0
    %544 = vmatprep.subr.mxu0 0.0
    %545 = vmatpush2.msra.mxu0 0.0
    %546 = vmatprep.subr.mxu0 0.0
    %547 = vmatpush2.msra.mxu0 0.0
    %548 = vmatprep.subr.mxu0 0.0
    %549 = vmatpush2.msra.mxu0 0.0
    %550 = vmatprep.subr.mxu0 0.0
    %551 = vmatpush2.msra.mxu0 0.0
    %552 = vmatprep.subr.mxu0 0.0
    %553 = vmatpush2.msra.mxu0 0.0
    %554 = vmatprep.subr.mxu0 0.0
    %555 = vmatpush2.msra.mxu0 0.0
    %556 = vmatprep.subr.mxu0 0.0
    %557 = vmatpush2.msra.mxu0 0.0
    %558 = vmatprep.mubr.f32.mxu0 0.0
    %559 = vmatmul.mubr.f32.gmra.mxu0 %v492
    %v560 = vpop.f32.mrf.mxu0
    %v561 = vadd.f32 %v487, %v560
    %v562 = vpop.f32.mrf.mxu0
    %563 = vdwg.mxu0
    %v564 = vtanh.pop %v561
    %v565 = vld [vmem:[%s11] sm:$0xff]
    %v566 = vld [vmem:[%s11 + $0x8] sm:$0xff]
    %v567 = vld [vmem:[%s11 + $0x10] sm:$0xff]
    %v568 = vld [vmem:[%s11 + $0x18] sm:$0xff]
    %v569 = vld [vmem:[%s12] sm:$0x1]
    %v571 = vlaneseq
    %v572 = vshrl.u32 %v571, 7
    %v573 = vsub.s32 0, %v572
    %v574 = vrot.slane %v569, %v573
    %v577 = vsel %vm191, %v564, 0
    %579 = vmatprep.subr.mxu0 0.0
    %580 = vmatpush1.msra.mxu0 0.0
    %581 = vmatprep.subr.mxu0 0.0
    %582 = vmatpush1.msra.mxu0 0.0
    %583 = vmatprep.subr.mxu0 0.0
    %584 = vmatpush1.msra.mxu0 0.0
    %585 = vmatprep.subr.mxu0 0.0
    %586 = vmatpush1.msra.mxu0 0.0
    %587 = vmatprep.subr.mxu0 0.0
    %588 = vmatpush1.msra.mxu0 0.0
    %589 = vmatprep.subr.mxu0 0.0
    %590 = vmatpush1.msra.mxu0 0.0
    %591 = vmatprep.subr.mxu0 0.0
    %592 = vmatpush1.msra.mxu0 0.0
    %593 = vmatprep.subr.mxu0 0.0
    %594 = vmatpush1.msra.mxu0 0.0
    %595 = vmatprep.subr.mxu0 0.0
    %596 = vmatpush1.msra.mxu0 0.0
    %597 = vmatprep.subr.mxu0 0.0
    %598 = vmatpush1.msra.mxu0 0.0
    %599 = vmatprep.subr.mxu0 0.0
    %600 = vmatpush1.msra.mxu0 0.0
    %601 = vmatprep.subr.mxu0 0.0
    %602 = vmatpush1.msra.mxu0 0.0
    %603 = vmatprep.subr.mxu0 0.0
    %604 = vmatpush1.msra.mxu0 %v568
    %605 = vmatprep.subr.mxu0 0.0
    %606 = vmatpush1.msra.mxu0 %v567
    %607 = vmatprep.subr.mxu0 0.0
    %608 = vmatpush1.msra.mxu0 %v566
    %609 = vmatprep.subr.mxu0 0.0
    %610 = vmatpush1.msra.mxu0 %v565
    %611 = vmatprep.subr.mxu0 0.0
    %612 = vmatpush2.msra.mxu0 0.0
    %613 = vmatprep.subr.mxu0 0.0
    %614 = vmatpush2.msra.mxu0 0.0
    %615 = vmatprep.subr.mxu0 0.0
    %616 = vmatpush2.msra.mxu0 0.0
    %617 = vmatprep.subr.mxu0 0.0
    %618 = vmatpush2.msra.mxu0 0.0
    %619 = vmatprep.subr.mxu0 0.0
    %620 = vmatpush2.msra.mxu0 0.0
    %621 = vmatprep.subr.mxu0 0.0
    %622 = vmatpush2.msra.mxu0 0.0
    %623 = vmatprep.subr.mxu0 0.0
    %624 = vmatpush2.msra.mxu0 0.0
    %625 = vmatprep.subr.mxu0 0.0
    %626 = vmatpush2.msra.mxu0 0.0
    %627 = vmatprep.subr.mxu0 0.0
    %628 = vmatpush2.msra.mxu0 0.0
    %629 = vmatprep.subr.mxu0 0.0
    %630 = vmatpush2.msra.mxu0 0.0
    %631 = vmatprep.subr.mxu0 0.0
    %632 = vmatpush2.msra.mxu0 0.0
    %633 = vmatprep.subr.mxu0 0.0
    %634 = vmatpush2.msra.mxu0 0.0
    %635 = vmatprep.subr.mxu0 0.0
    %636 = vmatpush2.msra.mxu0 0.0
    %637 = vmatprep.subr.mxu0 0.0
    %638 = vmatpush2.msra.mxu0 0.0
    %639 = vmatprep.subr.mxu0 0.0
    %640 = vmatpush2.msra.mxu0 0.0
    %641 = vmatprep.subr.mxu0 0.0
    %642 = vmatpush2.msra.mxu0 0.0
    %643 = vmatprep.mubr.f32.mxu0 0.0
    %644 = vmatmul.mubr.f32.gmra.mxu0 %v577
    %v645 = vpop.f32.mrf.mxu0
    %v646 = vadd.f32 %v574, %v645
    %v647 = vpop.f32.mrf.mxu0
    %648 = vdwg.mxu0
    %v649 = vtanh.pop %v646
    %651 = vrot.lane.b32.xlu0 %v347, 6
    %v652 = vpop.permute.xlu0 %651
    %655 = vrot.lane.b32.xlu0 %v361, 10
    %v656 = vpop.permute.xlu0 %655
    %vm658 = vcmask 48128
    %v659 = vsel %vm658, %v649, %v652
    %vm660 = vcmask 80896
    %v661 = vsel %vm660, %v659, %v656
    %vm662 = vcmask 113664
    %v663 = vsel %vm662, %v661, 0.0
    %664 = vst [vmem:[#allocation10] sm:$0xff] %v663
    // Predicated region
    $region70: #{tpu_custom_call.1} parent=1 // pred_check
      _
    $region71: #{tpu_custom_call.1} parent=1 // pred_check_branch
      %666 = sbr.rel (0) target = $region73
    $region72: #{tpu_custom_call.1} parent=1 // pred_region
      %s668 = ssub.s32 128, 128
      %669 = vsyncadd [#allocation4], %s668
      %s671 = sshll.u32 [#allocation10], 4
      %s672 = int_to_ptr.vmem [resolvable:$true] %s671
      %674 = dma.vmem_to_hbm [thread:$0]  %s672, 128, %s13, [#allocation4]
    $region73: #{tpu_custom_call.1} parent=1 // pred_fallthru
      _
    // Predicated region
    $region74: #{tpu_custom_call.1} parent=1 // pred_check
      _
    $region75: #{tpu_custom_call.1} parent=1 // pred_check_branch
      %676 = sbr.rel (0) target = $region77
    $region76: #{tpu_custom_call.1} parent=1 // pred_region
      %677 = dma.done [#allocation4], 128
    $region77: #{tpu_custom_call.1} parent=1 // pred_fallthru
      _
    %678 = vsyncpa [#allocation3], 1
    %679 = vsyncpa [#allocation6], 1
    %680 = vsyncpa [#allocation9], 1
    %681 = vsyncpa [#allocation4], 1

</llo_original>
